<compile_context>
chip_gen: v7x
topology: tpu7x:2x2x1
jax: 0.10.0
libtpu: 0.0.40
codegen_flags: <defaults>
</compile_context>

<pallas_src>
import math

import jax
import jax.numpy as jnp
from jax import lax
from jax.experimental import pallas as pl
from jax.experimental.pallas import tpu as pltpu

_LANES = 128
_SUBLANES = 8
# 4096 rows x 128 lanes x 4 B = 2 MiB per f32 block.
_MAX_ROW_BLOCK = 4096


def _round_up(x, m):
    return ((x + m - 1) // m) * m


def _gelu_kernel(x_ref, o_ref):
    x = x_ref[...]
    xf = x.astype(jnp.float32)
    inv_sqrt2 = jnp.float32(1.0 / math.sqrt(2.0))
    # Exact-erf GELU, matching torch.nn.functional.gelu(approximate='none').
    y = jnp.float32(0.5) * xf * (jnp.float32(1.0) + lax.erf(xf * inv_sqrt2))
    o_ref[...] = y.astype(o_ref.dtype)


def gelu(x):
    """Exact-erf GELU matching torch.nn.functional.gelu (default approximate='none')."""
    orig_shape = x.shape
    orig_dtype = x.dtype
    n = x.size
    if n == 0:
        return x

    flat = x.reshape(-1)

    # Pad only to a lane multiple (128) so the 2D lane-dense view is valid.
    # For typical activation tensors n % 128 == 0 and this is a no-op.
    padded_n = _round_up(n, _LANES)
    if padded_n != n:
        flat = jnp.pad(flat, (0, padded_n - n))

    rows = padded_n // _LANES
    x2d = flat.reshape(rows, _LANES)

    # Largest useful block, multiple of 8 sublanes (Pallas masks the ragged
    # final block if block_rows does not divide rows).
    block_rows = min(_MAX_ROW_BLOCK, _round_up(rows, _SUBLANES))
    grid = (pl.cdiv(rows, block_rows),)

    itemsize = jnp.dtype(orig_dtype).itemsize
    cost = pl.CostEstimate(
        flops=8 * padded_n,
        transcendentals=padded_n,
        bytes_accessed=2 * padded_n * itemsize,
    )

    out2d = pl.pallas_call(
        _gelu_kernel,
        out_shape=jax.ShapeDtypeStruct((rows, _LANES), orig_dtype),
        grid_spec=pltpu.PrefetchScalarGridSpec(
            num_scalar_prefetch=0,
            grid=grid,
            in_specs=[pl.BlockSpec((block_rows, _LANES), lambda i: (i, 0))],
            out_specs=pl.BlockSpec((block_rows, _LANES), lambda i: (i, 0)),
        ),
        compiler_params=pltpu.CompilerParams(
            dimension_semantics=("parallel",),
            vmem_limit_bytes=32 * 1024 * 1024,
        ),
        cost_estimate=cost,
    )(x2d)

    out_flat = out2d.reshape(-1)
    if padded_n != n:
        out_flat = out_flat[:n]
    return out_flat.reshape(orig_shape)


if __name__ == "__main__":
    key = jax.random.PRNGKey(0)
    # NCHW input, consistent with the PaddleOCR conv-stack usage of GELU.
    x = jax.random.normal(key, (2, 4, 16, 16), dtype=jnp.float32)

    y = gelu(x)
    y = jax.block_until_ready(y)

    # Sanity check against plain-JAX exact GELU.
    y_ref = jax.nn.gelu(x, approximate=False)
    assert y.shape == x.shape and y.dtype == x.dtype
    assert jnp.allclose(y, y_ref, atol=1e-6, rtol=1e-6)

    print("KERNEL_OK")
</pallas_src>

<mosaic_0001>
module attributes {stable_mosaic.version = 11 : i64} {
  func.func @_gelu_kernel(%arg0: i32, %arg1: memref<16x128xf32, #tpu.memory_space<vmem>>, %arg2: memref<16x128xf32, #tpu.memory_space<vmem>>) attributes {dimension_semantics = [#tpu.dimension_semantics<parallel>], iteration_bounds = array<i64: 1>, scalar_prefetch = 0 : i64, scratch_operands = 0 : i64, tpu.core_type = #tpu.core_type<tc>, window_params = [{transform_indices = @transform_0, window_bounds = array<i64: 16, 128>}, {transform_indices = @transform_1, window_bounds = array<i64: 16, 128>}]} {
    %c0 = arith.constant 0 : index
    %c0_0 = arith.constant 0 : index
    %0 = vector.load %arg1[%c0, %c0_0] : memref<16x128xf32, #tpu.memory_space<vmem>>, vector<16x128xf32>
    %cst = arith.constant 5.000000e-01 : f32
    %1 = vector.broadcast %cst : f32 to vector<16x128xf32>
    %2 = arith.mulf %1, %0 : vector<16x128xf32>
    %cst_1 = arith.constant 0.707106769 : f32
    %3 = vector.broadcast %cst_1 : f32 to vector<16x128xf32>
    %4 = arith.mulf %0, %3 : vector<16x128xf32>
    %5 = math.erf %4 : vector<16x128xf32>
    %cst_2 = arith.constant 1.000000e+00 : f32
    %6 = vector.broadcast %cst_2 : f32 to vector<16x128xf32>
    %7 = arith.addf %6, %5 : vector<16x128xf32>
    %8 = arith.mulf %2, %7 : vector<16x128xf32>
    %c0_3 = arith.constant 0 : index
    %c0_4 = arith.constant 0 : index
    %9 = vector.load %arg2[%c0_3, %c0_4] : memref<16x128xf32, #tpu.memory_space<vmem>>, vector<16x128xf32>
    tpu.vector_store %arg2[%c0_3, %c0_4], %8 {strides = array<i32>} : memref<16x128xf32, #tpu.memory_space<vmem>>, vector<16x128xf32>,
    return
  }
  func.func @transform_0(%arg0: i32) -> (i32, i32) {
    %c0_i32 = arith.constant 0 : i32
    %c0_i32_0 = arith.constant 0 : i32
    return %arg0, %c0_i32 : i32, i32
  }
  func.func @transform_1(%arg0: i32) -> (i32, i32) {
    %c0_i32 = arith.constant 0 : i32
    %c0_i32_0 = arith.constant 0 : i32
    return %arg0, %c0_i32 : i32, i32
  }
}

</mosaic_0001>

<llo_original>
// kernel: tpu_custom_call.1
$region0: #{tpu_custom_call.1}
  #allocation0 [shape = 'u32[]', space=smem, size = 0x4, offset = 0x4, fixed_abs, tag = 'smem constant byte address 0x4 - core index']
  #allocation1 [shape = 'u32[144,128]{1,0:T(1,128)}', space=vmem, size = 0x12000, scoped, tag = 'internal scratch']
  %s0 = inlined_call_operand.hbm [shape: f32[16,128], index: 0, kind: input, shape index: {}]
  %s1 = inlined_call_operand.hbm [shape: f32[16,128], index: 1, kind: output, shape index: {}]
  %s2 = sld [smem:[#allocation0]]
  $region18: #{tpu_custom_call.1} parent=0
    _
  %s4 = ssub.s32 1, %s2
  %s5 = scalar_select 0, %s4, %s2
  $region1: #{tpu_custom_call.1} parent=0
    #allocation2 [shape = 'u8[8192]{0}', space=vmem, size = 0x2000, scoped, tag = 'input window, operand 0, single buffered']
    #allocation3 [shape = 's32[1]{0}', space=sflag, size = 0x4, scoped, tag = 'scoped memory for tpu_custom_call.1']
    #allocation4 [shape = 's32[1]{0}', space=sflag, size = 0x4, scoped, tag = 'scoped memory for tpu_custom_call.1']
    #allocation5 [shape = 'u8[8192]{0}', space=vmem, size = 0x2000, scoped, tag = 'output window, operand 0, single buffered']
    %6 = vsyncpa [#allocation3], 0
    %7 = vsyncpa [#allocation4], 0
    // Predicated region
    $region2: #{tpu_custom_call.1} parent=1 // pred_check
      _
    $region3: #{tpu_custom_call.1} parent=1 // pred_check_branch
      %9 = sbr.rel (0) target = $region5
    $region4: #{tpu_custom_call.1} parent=1 // pred_region
      %s11 = ssub.s32 256, 256
      %12 = vsyncadd [#allocation3], %s11
      %s13 = sshll.u32 [#allocation2], 4
      %s14 = int_to_ptr.vmem [resolvable:$true] %s13
      %19 = dma.hbm_to_vmem [thread:$0]  %s0, 256, %s14, [#allocation3], 128, 128, 8
    $region5: #{tpu_custom_call.1} parent=1 // pred_fallthru
      _
    // Predicated region
    $region6: #{tpu_custom_call.1} parent=1 // pred_check
      _
    $region7: #{tpu_custom_call.1} parent=1 // pred_check_branch
      %21 = sbr.rel (0) target = $region9
    $region8: #{tpu_custom_call.1} parent=1 // pred_region
      %22 = dma.done [#allocation3], 256
    $region9: #{tpu_custom_call.1} parent=1 // pred_fallthru
      _
    %v23 = vld [vmem:[#allocation2] sm:$0xff]
    %v24 = vld [vmem:[#allocation2 + $0x8] sm:$0xff]
    %v25 = vmul.f32 %v23, 0.5
    %v26 = vmul.f32 %v24, 0.5
    %v27 = vmul.f32 %v23, 0.70710677
    %v28 = vmul.f32 %v24, 0.70710677
    %v29 = verf.f32.pop %v27
    %v30 = verf.f32.pop %v28
    %v31 = vadd.f32 %v29, 1.0
    %v32 = vadd.f32 %v30, 1.0
    %v33 = vmul.f32 %v25, %v31
    %v34 = vmul.f32 %v26, %v32
    %35 = vst [vmem:[#allocation5] sm:$0xff] %v33
    %36 = vst [vmem:[#allocation5 + $0x8] sm:$0xff] %v34
    // Predicated region
    $region10: #{tpu_custom_call.1} parent=1 // pred_check
      _
    $region11: #{tpu_custom_call.1} parent=1 // pred_check_branch
      %38 = sbr.rel (0) target = $region13
    $region12: #{tpu_custom_call.1} parent=1 // pred_region
      %s40 = ssub.s32 256, 256
      %41 = vsyncadd [#allocation4], %s40
      %s42 = sshll.u32 [#allocation5], 4
      %s43 = int_to_ptr.vmem [resolvable:$true] %s42
      %48 = dma.vmem_to_hbm [thread:$0]  %s43, 256, %s1, [#allocation4], 128, 128, 8
    $region13: #{tpu_custom_call.1} parent=1 // pred_fallthru
      _
    // Predicated region
    $region14: #{tpu_custom_call.1} parent=1 // pred_check
      _
    $region15: #{tpu_custom_call.1} parent=1 // pred_check_branch
      %50 = sbr.rel (0) target = $region17
    $region16: #{tpu_custom_call.1} parent=1 // pred_region
      %51 = dma.done [#allocation4], 256
    $region17: #{tpu_custom_call.1} parent=1 // pred_fallthru
      _
    %52 = vsyncpa [#allocation3], 1
    %53 = vsyncpa [#allocation4], 1

</llo_original>
